<compile_context>
chip_gen: v6e
topology: v6e:2x2x1
jax: 0.10.0
libtpu: 0.0.40
codegen_flags: <defaults>
</compile_context>

<pallas_src>
import functools

import jax
import jax.numpy as jnp
from jax.experimental import pallas as pl
from jax.experimental.pallas import tpu as pltpu

INPUT_SIZE = 768
DROP_P = 0.1


# ----------------------------------------------------------------------------
# Fused kernel: y[:, j-slab] = (x * mask) @ Wt[:, j-slab] + b[j-slab]
#   x_ref, mask_ref : [B, K]  f32 (resident across the grid)
#   w_ref           : [K, tn] bf16 (pre-transposed column slab of W.T)
#   b_ref           : [1, tn] f32
#   o_ref           : [B, tn] f32
# ----------------------------------------------------------------------------
def _fused_dropout_linear_kernel(x_ref, mask_ref, w_ref, b_ref, o_ref):
    xd = (x_ref[...] * mask_ref[...]).astype(w_ref.dtype)  # dropout, cast to bf16
    acc = jnp.dot(xd, w_ref[...], preferred_element_type=jnp.float32)
    o_ref[...] = (acc + b_ref[...]).astype(o_ref.dtype)


def fused_dropout_linear(x, mask, w_t, bias2d, *, n_splits=2):
    B, K = x.shape
    Kw, N = w_t.shape
    assert Kw == K and N % n_splits == 0
    tn = N // n_splits
    assert tn % 128 == 0, "column slab must be lane-aligned"

    return pl.pallas_call(
        _fused_dropout_linear_kernel,
        out_shape=jax.ShapeDtypeStruct((B, N), jnp.float32),
        grid=(n_splits,),
        in_specs=[
            pl.BlockSpec((B, K), lambda j: (0, 0)),    # x (resident)
            pl.BlockSpec((B, K), lambda j: (0, 0)),    # dropout mask (resident)
            pl.BlockSpec((K, tn), lambda j: (0, j)),   # Wt column slab
            pl.BlockSpec((1, tn), lambda j: (0, j)),   # bias slab
        ],
        out_specs=pl.BlockSpec((B, tn), lambda j: (0, j)),
        compiler_params=pltpu.CompilerParams(
            dimension_semantics=("parallel",)
        ),
    )(x, mask, w_t, bias2d)


# ----------------------------------------------------------------------------
# Dropout mask (training semantics: keep with prob 1-p, scale kept by 1/(1-p))
# ----------------------------------------------------------------------------
def make_dropout_mask(key, shape, p=DROP_P, dtype=jnp.float32):
    keep = jax.random.bernoulli(key, 1.0 - p, shape)
    return keep.astype(dtype) * jnp.asarray(1.0 / (1.0 - p), dtype)


@functools.partial(jax.jit, static_argnames=("training", "n_splits"))
def coconut_forward(x, w_t, bias2d, dropout_key, *, training=True, n_splits=2):
    if training:
        mask = make_dropout_mask(dropout_key, x.shape, DROP_P, x.dtype)
    else:
        mask = jnp.ones_like(x)
    return fused_dropout_linear(x, mask, w_t, bias2d, n_splits=n_splits)


# ----------------------------------------------------------------------------
# Parameter init (mirrors CoconutModel.create_params / reset_params)
# ----------------------------------------------------------------------------
def init_params(key, in_features=INPUT_SIZE, out_features=INPUT_SIZE):
    kw, kb = jax.random.split(key)
    # xavier_normal_ on fc1.weight ([out, in]): std = sqrt(2 / (fan_in + fan_out))
    std = (2.0 / (in_features + out_features)) ** 0.5
    weight = std * jax.random.normal(kw, (out_features, in_features), jnp.float32)
    # PyTorch Linear default bias init: U(-1/sqrt(in), 1/sqrt(in))
    bound = 1.0 / (in_features ** 0.5)
    bias = jax.random.uniform(
        kb, (out_features,), jnp.float32, minval=-bound, maxval=bound
    )
    return weight, bias


def prepare_params(weight, bias):
    """One-time layout prep: pre-transpose + bf16-cast W, 2-D bias."""
    w_t = jnp.asarray(weight).T.astype(jnp.bfloat16)          # [in, out] bf16
    bias2d = jnp.asarray(bias).reshape(1, -1).astype(jnp.float32)
    return w_t, bias2d


if __name__ == "__main__":
    key = jax.random.PRNGKey(0)
    kparam, kx, kdrop = jax.random.split(key, 3)

    weight, bias = init_params(kparam)
    w_t, bias2d = prepare_params(weight, bias)   # done once at init, not per call

    B = 8  # small batch; feature dim fixed at 768 by the module
    x = jax.random.normal(kx, (B, INPUT_SIZE), jnp.float32)

    out = coconut_forward(x, w_t, bias2d, kdrop, training=True, n_splits=2)
    out = jax.block_until_ready(out)

    # Pure-JAX reference using the same mask and the same bf16-rounded operands.
    mask = make_dropout_mask(kdrop, x.shape, DROP_P, x.dtype)
    dropped = x * mask
    dropped_bf = dropped.astype(jnp.bfloat16).astype(jnp.float32)
    w_f = w_t.astype(jnp.float32)
    ref = dropped_bf @ w_f + bias2d

    assert out.shape == (B, INPUT_SIZE)
    assert bool(jnp.all(jnp.isfinite(out)))
    assert jnp.allclose(out, ref, atol=2e-3, rtol=2e-3), "mismatch vs reference"

    print("KERNEL_OK")
</pallas_src>

<mosaic_0001>
module attributes {stable_mosaic.version = 11 : i64} {
  func.func @_fused_dropout_linear_kernel(%arg0: i32, %arg1: memref<8x768xf32, #tpu.memory_space<vmem>>, %arg2: memref<8x768xf32, #tpu.memory_space<vmem>>, %arg3: memref<768x384xbf16, #tpu.memory_space<vmem>>, %arg4: memref<1x384xf32, #tpu.memory_space<vmem>>, %arg5: memref<8x384xf32, #tpu.memory_space<vmem>>) attributes {dimension_semantics = [#tpu.dimension_semantics<parallel>], iteration_bounds = array<i64: 2>, scalar_prefetch = 0 : i64, scratch_operands = 0 : i64, tpu.core_type = #tpu.core_type<tc>, window_params = [{pipeline_mode = #tpu.pipeline_mode<synchronous>, transform_indices = @transform_0, window_bounds = array<i64: 8, 768>}, {pipeline_mode = #tpu.pipeline_mode<synchronous>, transform_indices = @transform_1, window_bounds = array<i64: 8, 768>}, {transform_indices = @transform_2, window_bounds = array<i64: 768, 384>}, {transform_indices = @transform_3, window_bounds = array<i64: 1, 384>}, {transform_indices = @transform_4, window_bounds = array<i64: 8, 384>}]} {
    %c0 = arith.constant 0 : index
    %c0_0 = arith.constant 0 : index
    %0 = vector.load %arg1[%c0, %c0_0] : memref<8x768xf32, #tpu.memory_space<vmem>>, vector<8x768xf32>
    %c0_1 = arith.constant 0 : index
    %c0_2 = arith.constant 0 : index
    %1 = vector.load %arg2[%c0_1, %c0_2] : memref<8x768xf32, #tpu.memory_space<vmem>>, vector<8x768xf32>
    %2 = arith.mulf %0, %1 : vector<8x768xf32>
    %3 = arith.truncf %2 : vector<8x768xf32> to vector<8x768xbf16>
    %c0_3 = arith.constant 0 : index
    %c0_4 = arith.constant 0 : index
    %4 = vector.load %arg3[%c0_3, %c0_4] : memref<768x384xbf16, #tpu.memory_space<vmem>>, vector<768x384xbf16>
    %cst = arith.constant dense<0.000000e+00> : vector<8x384xf32>
    %5 = tpu.matmul %3, %4, %cst {dimension_numbers = #tpu.dot_dimension_numbers<[1], [0], [0], [1], [0, 0, 1, 1], [], []>} : vector<8x768xbf16>, vector<768x384xbf16>, vector<8x384xf32> -> vector<8x384xf32>
    %c0_5 = arith.constant 0 : index
    %c0_6 = arith.constant 0 : index
    %6 = vector.load %arg4[%c0_5, %c0_6] : memref<1x384xf32, #tpu.memory_space<vmem>>, vector<1x384xf32>
    %7 = vector.broadcast %6 : vector<1x384xf32> to vector<8x384xf32>
    %8 = arith.addf %5, %7 : vector<8x384xf32>
    %c0_7 = arith.constant 0 : index
    %c0_8 = arith.constant 0 : index
    %9 = vector.load %arg5[%c0_7, %c0_8] : memref<8x384xf32, #tpu.memory_space<vmem>>, vector<8x384xf32>
    tpu.vector_store %arg5[%c0_7, %c0_8], %8 {strides = array<i32>} : memref<8x384xf32, #tpu.memory_space<vmem>>, vector<8x384xf32>,
    return
  }
  func.func @transform_0(%arg0: i32) -> (i32, i32) {
    %c0_i32 = arith.constant 0 : i32
    %c0_i32_0 = arith.constant 0 : i32
    %c0_i32_1 = arith.constant 0 : i32
    return %c0_i32, %c0_i32_0 : i32, i32
  }
  func.func @transform_1(%arg0: i32) -> (i32, i32) {
    %c0_i32 = arith.constant 0 : i32
    %c0_i32_0 = arith.constant 0 : i32
    %c0_i32_1 = arith.constant 0 : i32
    return %c0_i32, %c0_i32_0 : i32, i32
  }
  func.func @transform_2(%arg0: i32) -> (i32, i32) {
    %c0_i32 = arith.constant 0 : i32
    %c0_i32_0 = arith.constant 0 : i32
    return %c0_i32, %arg0 : i32, i32
  }
  func.func @transform_3(%arg0: i32) -> (i32, i32) {
    %c0_i32 = arith.constant 0 : i32
    %c0_i32_0 = arith.constant 0 : i32
    return %c0_i32, %arg0 : i32, i32
  }
  func.func @transform_4(%arg0: i32) -> (i32, i32) {
    %c0_i32 = arith.constant 0 : i32
    %c0_i32_0 = arith.constant 0 : i32
    return %c0_i32, %arg0 : i32, i32
  }
}

</mosaic_0001>

<llo_original>
// kernel: coconut_forward.1
$region0: #{coconut_forward.1}
  #allocation0 [shape = 'u32[]', space=smem, size = 0x4, offset = 0x4, fixed_abs, tag = 'smem constant byte address 0x4 - core index']
  #allocation1 [shape = 'u32[144,128]{1,0:T(1,128)}', space=vmem, size = 0x12000, scoped, tag = 'internal scratch']
  %s0 = inlined_call_operand.hbm [shape: f32[8,768], index: 0, kind: input, shape index: {}]
  %s1 = inlined_call_operand.vmem [shape: f32[8,768], index: 1, kind: input, shape index: {}]
  %s2 = inlined_call_operand.hbm [shape: bf16[768,768], index: 2, kind: input, shape index: {}]
  %s3 = inlined_call_operand.hbm [shape: f32[1,768], index: 3, kind: input, shape index: {}]
  %s4 = inlined_call_operand.hbm [shape: f32[8,768], index: 4, kind: output, shape index: {}]
  %s5 = sld [smem:[#allocation0]]
  $region61: #{coconut_forward.1} parent=0
    _
  %s7 = ssub.s32 1, %s5
  %s8 = scalar_select 0, %s7, %s5
  $region1: #{coconut_forward.1} parent=0
    #allocation2 [shape = 'u8[24576]{0}', space=vmem, size = 0x6000, scoped, tag = 'input window, operand 0, single buffered']
    #allocation3 [shape = 's32[2]{0}', space=sflag, size = 0x8, scoped, tag = 'scoped memory for coconut_forward.1']
    #allocation4 [shape = 's32[2]{0}', space=sflag, size = 0x8, scoped, tag = 'scoped memory for coconut_forward.1']
    #allocation5 [shape = 'u8[1179648]{0}', space=vmem, size = 0x120000, scoped, tag = 'input window, operand 2']
    #allocation6 [shape = 's32[2]{0}', space=sflag, size = 0x8, scoped, tag = 'scoped memory for coconut_forward.1']
    #allocation7 [shape = 'u8[3072]{0}', space=vmem, size = 0xc00, scoped, tag = 'input window, operand 3']
    #allocation8 [shape = 'u8[24576]{0}', space=vmem, size = 0x6000, scoped, tag = 'output window, operand 0']
    %9 = vsyncpa [#allocation3], 0
    %10 = vsyncpa [#allocation6], 0
    %s11 = scalar_lea.sflag [#allocation6], 1
    %12 = vsyncpa %s11, 0
    %13 = vsyncpa [#allocation4], 0
    %s14 = scalar_lea.sflag [#allocation4], 1
    %15 = vsyncpa %s14, 0
    loop: start=0, step=1, limit=4
    $region2: #{coconut_forward.1} parent=1 // loop_pre_header
      _
    $region3: #{coconut_forward.1} parent=1 // loop_header
      %s17 = sphi 0, %s21
      %p18 = scmp.ge.s32.totalorder %s17, 4
      %s25 = sphi 0, %s25
      %s27 = sphi 0, %s25
      %s28 = sphi 0, %s27
      %s42 = sphi 0, %s28
      %s46 = sphi 0, %s46
      %s48 = sphi 0, %s46
      %s49 = sphi 0, %s48
      %s63 = sphi 0, %s49
      %s69 = sphi 0, %s71
      %s72 = sphi 0, %s69
      %s73 = sphi 0, %s72
      %s89 = sphi 0, %s73
      %s95 = sphi 0, %s97
      %s98 = sphi 0, %s95
      %s99 = sphi 0, %s98
      %s115 = sphi 0, %s99
      %s121 = sphi 0, %s123
      %s124 = sphi 0, %s121
      %s125 = sphi 0, %s124
      %s141 = sphi 0, %s125
    $region4: #{coconut_forward.1} parent=1 // loop_header_branch
      %20 = sbr.rel (%p18) target = $region8
    $region5: #{coconut_forward.1} parent=1 // loop_body
      %s22 = ssub.s32 %s17, 1
      %s23 = ssub.s32 %s17, 2
      %s24 = sadd.s32 %s17, 1
      %s26 = sadd.s32 %s25, 1
      %p29 = scmp.eq.s32.totalorder %s17, 1
      %p30 = scmp.ne.s32.totalorder %s25, %s27
      %p31 = scmp.eq.s32.totalorder %s17, 0
      %p32 = por %p30, %p31
      %p33 = scmp.ne.s32.totalorder %s25, %s27
      %p34 = scmp.eq.s32.totalorder %s22, 1
      %p35 = por %p33, %p34
      %p36 = scmp.ne.s32.totalorder %s27, %s28
      %p37 = scmp.eq.s32.totalorder %s22, 0
      %p38 = por %p36, %p37
      %p39 = scmp.ne.s32.totalorder %s27, %s28
      %p40 = scmp.eq.s32.totalorder %s23, 1
      %p41 = por %p39, %p40
      %p43 = scmp.ne.s32.totalorder %s28, %s42
      %p44 = scmp.eq.s32.totalorder %s23, 0
      %p45 = por %p43, %p44
      %s47 = sadd.s32 %s46, 1
      %p50 = scmp.eq.s32.totalorder %s17, 1
      %p51 = scmp.ne.s32.totalorder %s46, %s48
      %p52 = scmp.eq.s32.totalorder %s17, 0
      %p53 = por %p51, %p52
      %p54 = scmp.ne.s32.totalorder %s46, %s48
      %p55 = scmp.eq.s32.totalorder %s22, 1
      %p56 = por %p54, %p55
      %p57 = scmp.ne.s32.totalorder %s48, %s49
      %p58 = scmp.eq.s32.totalorder %s22, 0
      %p59 = por %p57, %p58
      %p60 = scmp.ne.s32.totalorder %s48, %s49
      %p61 = scmp.eq.s32.totalorder %s23, 1
      %p62 = por %p60, %p61
      %p64 = scmp.ne.s32.totalorder %s49, %s63
      %p65 = scmp.eq.s32.totalorder %s23, 0
      %p66 = por %p64, %p65
      %s67 = ssub.s32 %s17, %s24
      %p68 = scmp.eq.s32.totalorder %s67, 0
      %s70 = sadd.s32 %s69, 1
      %s71 = scalar_select %p68, %s69, %s70
      %p74 = pneg %p68
      %p75 = scmp.eq.s32.totalorder %s17, 1
      %p76 = por %p74, %p75
      %p77 = scmp.ne.s32.totalorder %s69, %s72
      %p78 = scmp.eq.s32.totalorder %s17, 0
      %p79 = por %p77, %p78
      %p80 = scmp.ne.s32.totalorder %s69, %s72
      %p81 = scmp.eq.s32.totalorder %s22, 1
      %p82 = por %p80, %p81
      %p83 = scmp.ne.s32.totalorder %s72, %s73
      %p84 = scmp.eq.s32.totalorder %s22, 0
      %p85 = por %p83, %p84
      %p86 = scmp.ne.s32.totalorder %s72, %s73
      %p87 = scmp.eq.s32.totalorder %s23, 1
      %p88 = por %p86, %p87
      %p90 = scmp.ne.s32.totalorder %s73, %s89
      %p91 = scmp.eq.s32.totalorder %s23, 0
      %p92 = por %p90, %p91
      %s93 = ssub.s32 %s17, %s24
      %p94 = scmp.eq.s32.totalorder %s93, 0
      %s96 = sadd.s32 %s95, 1
      %s97 = scalar_select %p94, %s95, %s96
      %p100 = pneg %p94
      %p101 = scmp.eq.s32.totalorder %s17, 1
      %p102 = por %p100, %p101
      %p103 = scmp.ne.s32.totalorder %s95, %s98
      %p104 = scmp.eq.s32.totalorder %s17, 0
      %p105 = por %p103, %p104
      %p106 = scmp.ne.s32.totalorder %s95, %s98
      %p107 = scmp.eq.s32.totalorder %s22, 1
      %p108 = por %p106, %p107
      %p109 = scmp.ne.s32.totalorder %s98, %s99
      %p110 = scmp.eq.s32.totalorder %s22, 0
      %p111 = por %p109, %p110
      %p112 = scmp.ne.s32.totalorder %s98, %s99
      %p113 = scmp.eq.s32.totalorder %s23, 1
      %p114 = por %p112, %p113
      %p116 = scmp.ne.s32.totalorder %s99, %s115
      %p117 = scmp.eq.s32.totalorder %s23, 0
      %p118 = por %p116, %p117
      %s119 = ssub.s32 %s17, %s24
      %p120 = scmp.eq.s32.totalorder %s119, 0
      %s122 = sadd.s32 %s121, 1
      %s123 = scalar_select %p120, %s121, %s122
      %p126 = pneg %p120
      %p127 = scmp.eq.s32.totalorder %s17, 1
      %p128 = por %p126, %p127
      %p129 = scmp.ne.s32.totalorder %s121, %s124
      %p130 = scmp.eq.s32.totalorder %s17, 0
      %p131 = por %p129, %p130
      %p132 = scmp.ne.s32.totalorder %s121, %s124
      %p133 = scmp.eq.s32.totalorder %s22, 1
      %p134 = por %p132, %p133
      %p135 = scmp.ne.s32.totalorder %s124, %s125
      %p136 = scmp.eq.s32.totalorder %s22, 0
      %p137 = por %p135, %p136
      %p138 = scmp.ne.s32.totalorder %s124, %s125
      %p139 = scmp.eq.s32.totalorder %s23, 1
      %p140 = por %p138, %p139
      %p142 = scmp.ne.s32.totalorder %s125, %s141
      %p143 = scmp.eq.s32.totalorder %s23, 0
      %p144 = por %p142, %p143
      %p145 = scmp.le.s32.totalorder 1, %s17
      %p146 = scmp.lt.s32.totalorder %s17, 3
      %p147 = pnand %p145, %p146
      %p148 = pneg %p147
      // Predicated region
      $region9: #{coconut_forward.1} parent=5 // pred_check
        _
      $region10: #{coconut_forward.1} parent=5 // pred_check_branch
        %150 = sbr.rel (%p147) target = $region12
      $region11: #{coconut_forward.1} parent=5 // pred_region
        %s151 = ssub.s32 %s17, 1
        // Predicated region
        $region13: #{coconut_forward.1} parent=11 // pred_check
          %p152 = pneg %p38
        $region14: #{coconut_forward.1} parent=11 // pred_check_branch
          %154 = sbr.rel (%p152) target = $region16
        $region15: #{coconut_forward.1} parent=11 // pred_region
          %s156 = ssub.s32 768, 768
          %157 = vsyncadd [#allocation3], %s156
          %s159 = sshll.u32 [#allocation2], 4
          %s160 = int_to_ptr.vmem [resolvable:$true] %s159
          %162 = dma.hbm_to_vmem [thread:$0]  %s0, 768, %s160, [#allocation3]
        $region16: #{coconut_forward.1} parent=11 // pred_fallthru
          _
        // Predicated region
        $region17: #{coconut_forward.1} parent=11 // pred_check
          %p163 = pneg %p59
        $region18: #{coconut_forward.1} parent=11 // pred_check_branch
          %165 = sbr.rel (%p163) target = $region20
        $region19: #{coconut_forward.1} parent=11 // pred_region
          _
        $region20: #{coconut_forward.1} parent=11 // pred_fallthru
          _
      $region12: #{coconut_forward.1} parent=5 // pred_fallthru
        _
      %p166 = scmp.lt.s32.totalorder %s17, 2
      // Predicated region
      $region21: #{coconut_forward.1} parent=5 // pred_check
        %p167 = pneg %p166
      $region22: #{coconut_forward.1} parent=5 // pred_check_branch
        %169 = sbr.rel (%p167) target = $region24
      $region23: #{coconut_forward.1} parent=5 // pred_region
        // Predicated region
        $region25: #{coconut_forward.1} parent=23 // pred_check
          %p170 = pneg %p79
        $region26: #{coconut_forward.1} parent=23 // pred_check_branch
          %172 = sbr.rel (%p170) target = $region28
        $region27: #{coconut_forward.1} parent=23 // pred_region
          %s173 = sand.u32 %s17, 1
          %s174 = scalar_lea.sflag [#allocation6], %s173
          %s175 = sand.u32 %s69, 1
          %s176 = smul.addr %s175, 1152
          %s177 = scalar_lea.vmem [#allocation5], %s176
          %s178 = smul.u32 3, %s17
          %s180 = ssub.s32 18432, 18432
          %181 = vsyncadd %s174, %s180
          %s182 = smul.addr %s178, 64
          %s183 = scalar_lea.hbm %s2, %s182
          %s184 = sshll.u32 %s177, 4
          %s185 = int_to_ptr.vmem [resolvable:$true] %s184
          %190 = dma.hbm_to_vmem [thread:$0]  %s183, 18432, %s185, %s174, 384, 192, 12
        $region28: #{coconut_forward.1} parent=23 // pred_fallthru
          _
        // Predicated region
        $region29: #{coconut_forward.1} parent=23 // pred_check
          %p191 = pneg %p105
        $region30: #{coconut_forward.1} parent=23 // pred_check_branch
          %193 = sbr.rel (%p191) target = $region32
        $region31: #{coconut_forward.1} parent=23 // pred_region
          %s194 = sand.u32 %s17, 1
          %s195 = scalar_lea.sflag [#allocation6], %s194
          %s196 = sand.u32 %s95, 1
          %s197 = smul.addr %s196, 3
          %s198 = scalar_lea.vmem [#allocation7], %s197
          %s199 = smul.u32 3, %s17
          %s201 = ssub.s32 48, 48
          %202 = vsyncadd %s195, %s201
          %s203 = smul.addr %s199, 16
          %s204 = scalar_lea.hbm %s3, %s203
          %s206 = sshll.u32 %s198, 4
          %s207 = int_to_ptr.vmem [resolvable:$true] %s206
          %209 = dma.hbm_to_vmem [thread:$0]  %s204, 48, %s207, %s195
        $region32: #{coconut_forward.1} parent=23 // pred_fallthru
          _
      $region24: #{coconut_forward.1} parent=5 // pred_fallthru
        _
      %p210 = scmp.le.s32.totalorder 1, %s17
      %p211 = scmp.lt.s32.totalorder %s17, 3
      %p212 = pnand %p210, %p211
      %p213 = pneg %p212
      // Predicated region
      $region33: #{coconut_forward.1} parent=5 // pred_check
        _
      $region34: #{coconut_forward.1} parent=5 // pred_check_branch
        %215 = sbr.rel (%p212) target = $region36
      $region35: #{coconut_forward.1} parent=5 // pred_region
        %s216 = ssub.s32 %s17, 1
        // Predicated region
        $region37: #{coconut_forward.1} parent=35 // pred_check
          %p217 = pneg %p38
        $region38: #{coconut_forward.1} parent=35 // pred_check_branch
          %219 = sbr.rel (%p217) target = $region40
        $region39: #{coconut_forward.1} parent=35 // pred_region
          %220 = dma.done [#allocation3], 768
        $region40: #{coconut_forward.1} parent=35 // pred_fallthru
          _
        %s221 = sand.u32 %s22, 1
        %s222 = scalar_lea.sflag [#allocation6], %s221
        %s223 = sand.u32 %s72, 1
        %s224 = smul.addr %s223, 1152
        %s225 = scalar_lea.vmem [#allocation5], %s224
        // Predicated region
        $region41: #{coconut_forward.1} parent=35 // pred_check
          %p226 = pneg %p85
        $region42: #{coconut_forward.1} parent=35 // pred_check_branch
          %228 = sbr.rel (%p226) target = $region44
        $region43: #{coconut_forward.1} parent=35 // pred_region
          %229 = dma.done %s222, 18432
        $region44: #{coconut_forward.1} parent=35 // pred_fallthru
          _
        %s230 = sand.u32 %s22, 1
        %s231 = scalar_lea.sflag [#allocation6], %s230
        %s232 = sand.u32 %s98, 1
        %s233 = smul.addr %s232, 3
        %s234 = scalar_lea.vmem [#allocation7], %s233
        // Predicated region
        $region45: #{coconut_forward.1} parent=35 // pred_check
          %p235 = pneg %p111
        $region46: #{coconut_forward.1} parent=35 // pred_check_branch
          %237 = sbr.rel (%p235) target = $region48
        $region47: #{coconut_forward.1} parent=35 // pred_region
          %238 = dma.done %s231, 48
        $region48: #{coconut_forward.1} parent=35 // pred_fallthru
          _
        %p239 = pneg %p38
        %p240 = pneg %p35
        %p241 = pneg %p59
        %p242 = pneg %p56
        %s243 = sand.u32 %s22, 1
        %s244 = scalar_lea.sflag [#allocation6], %s243
        %s245 = sand.u32 %s72, 1
        %s246 = smul.addr %s245, 1152
        %s247 = scalar_lea.vmem [#allocation5], %s246
        %p248 = pneg %p85
        %p249 = pneg %p82
        %s250 = sand.u32 %s22, 1
        %s251 = scalar_lea.sflag [#allocation6], %s250
        %s252 = sand.u32 %s98, 1
        %s253 = smul.addr %s252, 3
        %s254 = scalar_lea.vmem [#allocation7], %s253
        %p255 = pneg %p111
        %p256 = pneg %p108
        %p257 = pneg %p137
        %p258 = pneg %p134
        %s259 = sand.u32 %s124, 1
        %s260 = scalar_lea.sflag [#allocation4], %s259
        %s261 = sand.u32 %s124, 1
        %s262 = smul.addr %s261, 24
        %s263 = scalar_lea.vmem [#allocation8], %s262
        %s264 = smul.u32 3, %s22
        %s265 = smul.u32 3, %s22
        %s266 = smul.u32 3, %s22
        %v268 = vld [vmem:[#allocation2] sm:$0xff]
        %v269 = vld [vmem:[#allocation2 + $0x8] sm:$0xff]
        %v270 = vld [vmem:[#allocation2 + $0x10] sm:$0xff]
        %v271 = vld [vmem:[#allocation2 + $0x18] sm:$0xff]
        %v272 = vld [vmem:[#allocation2 + $0x20] sm:$0xff]
        %v273 = vld [vmem:[#allocation2 + $0x28] sm:$0xff]
        %v274 = vld [vmem:[%s1] sm:$0xff]
        %v275 = vld [vmem:[%s1 + $0x8] sm:$0xff]
        %v276 = vld [vmem:[%s1 + $0x10] sm:$0xff]
        %v277 = vld [vmem:[%s1 + $0x18] sm:$0xff]
        %v278 = vld [vmem:[%s1 + $0x20] sm:$0xff]
        %v279 = vld [vmem:[%s1 + $0x28] sm:$0xff]
        %v280 = vmul.f32 %v268, %v274
        %v281 = vmul.f32 %v269, %v275
        %v282 = vmul.f32 %v270, %v276
        %v283 = vmul.f32 %v271, %v277
        %v284 = vmul.f32 %v272, %v278
        %v285 = vmul.f32 %v273, %v279
        %v286 = vpack.c.bf16 %v280, %v280
        %v287 = vpack.c.bf16 %v281, %v281
        %v288 = vpack.c.bf16 %v282, %v282
        %v289 = vpack.c.bf16 %v283, %v283
        %v290 = vpack.c.bf16 %v284, %v284
        %v291 = vpack.c.bf16 %v285, %v285
        %v292 = vld [vmem:[%s225] sm:$0xff]
        %v293 = vld [vmem:[%s225 + $0x8] sm:$0xf]
        %v294 = vld [vmem:[%s225 + $0xc] sm:$0xff]
        %v295 = vld [vmem:[%s225 + $0x14] sm:$0xf]
        %v296 = vld [vmem:[%s225 + $0x18] sm:$0xff]
        %v297 = vld [vmem:[%s225 + $0x20] sm:$0xf]
        %v298 = vld [vmem:[%s225 + $0x24] sm:$0xff]
        %v299 = vld [vmem:[%s225 + $0x2c] sm:$0xf]
        %v300 = vld [vmem:[%s225 + $0x30] sm:$0xff]
        %v301 = vld [vmem:[%s225 + $0x38] sm:$0xf]
        %v302 = vld [vmem:[%s225 + $0x3c] sm:$0xff]
        %v303 = vld [vmem:[%s225 + $0x44] sm:$0xf]
        %v304 = vld [vmem:[%s225 + $0x48] sm:$0xff]
        %v305 = vld [vmem:[%s225 + $0x50] sm:$0xf]
        %v306 = vld [vmem:[%s225 + $0x54] sm:$0xff]
        %v307 = vld [vmem:[%s225 + $0x5c] sm:$0xf]
        %v308 = vld [vmem:[%s225 + $0x60] sm:$0xff]
        %v309 = vld [vmem:[%s225 + $0x68] sm:$0xf]
        %v310 = vld [vmem:[%s225 + $0x6c] sm:$0xff]
        %v311 = vld [vmem:[%s225 + $0x74] sm:$0xf]
        %v312 = vld [vmem:[%s225 + $0x78] sm:$0xff]
        %v313 = vld [vmem:[%s225 + $0x80] sm:$0xf]
        %v314 = vld [vmem:[%s225 + $0x84] sm:$0xff]
        %v315 = vld [vmem:[%s225 + $0x8c] sm:$0xf]
        %v316 = vld [vmem:[%s225 + $0x90] sm:$0xff]
        %v317 = vld [vmem:[%s225 + $0x98] sm:$0xf]
        %v318 = vld [vmem:[%s225 + $0x9c] sm:$0xff]
        %v319 = vld [vmem:[%s225 + $0xa4] sm:$0xf]
        %v320 = vld [vmem:[%s225 + $0xa8] sm:$0xff]
        %v321 = vld [vmem:[%s225 + $0xb0] sm:$0xf]
        %v322 = vld [vmem:[%s225 + $0xb4] sm:$0xff]
        %v323 = vld [vmem:[%s225 + $0xbc] sm:$0xf]
        %v324 = vld [vmem:[%s225 + $0xc0] sm:$0xff]
        %v325 = vld [vmem:[%s225 + $0xc8] sm:$0xf]
        %v326 = vld [vmem:[%s225 + $0xcc] sm:$0xff]
        %v327 = vld [vmem:[%s225 + $0xd4] sm:$0xf]
        %v328 = vld [vmem:[%s225 + $0xd8] sm:$0xff]
        %v329 = vld [vmem:[%s225 + $0xe0] sm:$0xf]
        %v330 = vld [vmem:[%s225 + $0xe4] sm:$0xff]
        %v331 = vld [vmem:[%s225 + $0xec] sm:$0xf]
        %v332 = vld [vmem:[%s225 + $0xf0] sm:$0xff]
        %v333 = vld [vmem:[%s225 + $0xf8] sm:$0xf]
        %v334 = vld [vmem:[%s225 + $0xfc] sm:$0xff]
        %v335 = vld [vmem:[%s225 + $0x104] sm:$0xf]
        %v336 = vld [vmem:[%s225 + $0x108] sm:$0xff]
        %v337 = vld [vmem:[%s225 + $0x110] sm:$0xf]
        %v338 = vld [vmem:[%s225 + $0x114] sm:$0xff]
        %v339 = vld [vmem:[%s225 + $0x11c] sm:$0xf]
        %v340 = vld [vmem:[%s225 + $0x120] sm:$0xff]
        %v341 = vld [vmem:[%s225 + $0x128] sm:$0xf]
        %v342 = vld [vmem:[%s225 + $0x12c] sm:$0xff]
        %v343 = vld [vmem:[%s225 + $0x134] sm:$0xf]
        %v344 = vld [vmem:[%s225 + $0x138] sm:$0xff]
        %v345 = vld [vmem:[%s225 + $0x140] sm:$0xf]
        %v346 = vld [vmem:[%s225 + $0x144] sm:$0xff]
        %v347 = vld [vmem:[%s225 + $0x14c] sm:$0xf]
        %v348 = vld [vmem:[%s225 + $0x150] sm:$0xff]
        %v349 = vld [vmem:[%s225 + $0x158] sm:$0xf]
        %v350 = vld [vmem:[%s225 + $0x15c] sm:$0xff]
        %v351 = vld [vmem:[%s225 + $0x164] sm:$0xf]
        %v352 = vld [vmem:[%s225 + $0x168] sm:$0xff]
        %v353 = vld [vmem:[%s225 + $0x170] sm:$0xf]
        %v354 = vld [vmem:[%s225 + $0x174] sm:$0xff]
        %v355 = vld [vmem:[%s225 + $0x17c] sm:$0xf]
        %v356 = vld [vmem:[%s225 + $0x180] sm:$0xff]
        %v357 = vld [vmem:[%s225 + $0x188] sm:$0xf]
        %v358 = vld [vmem:[%s225 + $0x18c] sm:$0xff]
        %v359 = vld [vmem:[%s225 + $0x194] sm:$0xf]
        %v360 = vld [vmem:[%s225 + $0x198] sm:$0xff]
        %v361 = vld [vmem:[%s225 + $0x1a0] sm:$0xf]
        %v362 = vld [vmem:[%s225 + $0x1a4] sm:$0xff]
        %v363 = vld [vmem:[%s225 + $0x1ac] sm:$0xf]
        %v364 = vld [vmem:[%s225 + $0x1b0] sm:$0xff]
        %v365 = vld [vmem:[%s225 + $0x1b8] sm:$0xf]
        %v366 = vld [vmem:[%s225 + $0x1bc] sm:$0xff]
        %v367 = vld [vmem:[%s225 + $0x1c4] sm:$0xf]
        %v368 = vld [vmem:[%s225 + $0x1c8] sm:$0xff]
        %v369 = vld [vmem:[%s225 + $0x1d0] sm:$0xf]
        %v370 = vld [vmem:[%s225 + $0x1d4] sm:$0xff]
        %v371 = vld [vmem:[%s225 + $0x1dc] sm:$0xf]
        %v372 = vld [vmem:[%s225 + $0x1e0] sm:$0xff]
        %v373 = vld [vmem:[%s225 + $0x1e8] sm:$0xf]
        %v374 = vld [vmem:[%s225 + $0x1ec] sm:$0xff]
        %v375 = vld [vmem:[%s225 + $0x1f4] sm:$0xf]
        %v376 = vld [vmem:[%s225 + $0x1f8] sm:$0xff]
        %v377 = vld [vmem:[%s225 + $0x200] sm:$0xf]
        %v378 = vld [vmem:[%s225 + $0x204] sm:$0xff]
        %v379 = vld [vmem:[%s225 + $0x20c] sm:$0xf]
        %v380 = vld [vmem:[%s225 + $0x210] sm:$0xff]
        %v381 = vld [vmem:[%s225 + $0x218] sm:$0xf]
        %v382 = vld [vmem:[%s225 + $0x21c] sm:$0xff]
        %v383 = vld [vmem:[%s225 + $0x224] sm:$0xf]
        %v384 = vld [vmem:[%s225 + $0x228] sm:$0xff]
        %v385 = vld [vmem:[%s225 + $0x230] sm:$0xf]
        %v386 = vld [vmem:[%s225 + $0x234] sm:$0xff]
        %v387 = vld [vmem:[%s225 + $0x23c] sm:$0xf]
        %v388 = vld [vmem:[%s225 + $0x240] sm:$0xff]
        %v389 = vld [vmem:[%s225 + $0x248] sm:$0xf]
        %v390 = vld [vmem:[%s225 + $0x24c] sm:$0xff]
        %v391 = vld [vmem:[%s225 + $0x254] sm:$0xf]
        %v392 = vld [vmem:[%s225 + $0x258] sm:$0xff]
        %v393 = vld [vmem:[%s225 + $0x260] sm:$0xf]
        %v394 = vld [vmem:[%s225 + $0x264] sm:$0xff]
        %v395 = vld [vmem:[%s225 + $0x26c] sm:$0xf]
        %v396 = vld [vmem:[%s225 + $0x270] sm:$0xff]
        %v397 = vld [vmem:[%s225 + $0x278] sm:$0xf]
        %v398 = vld [vmem:[%s225 + $0x27c] sm:$0xff]
        %v399 = vld [vmem:[%s225 + $0x284] sm:$0xf]
        %v400 = vld [vmem:[%s225 + $0x288] sm:$0xff]
        %v401 = vld [vmem:[%s225 + $0x290] sm:$0xf]
        %v402 = vld [vmem:[%s225 + $0x294] sm:$0xff]
        %v403 = vld [vmem:[%s225 + $0x29c] sm:$0xf]
        %v404 = vld [vmem:[%s225 + $0x2a0] sm:$0xff]
        %v405 = vld [vmem:[%s225 + $0x2a8] sm:$0xf]
        %v406 = vld [vmem:[%s225 + $0x2ac] sm:$0xff]
        %v407 = vld [vmem:[%s225 + $0x2b4] sm:$0xf]
        %v408 = vld [vmem:[%s225 + $0x2b8] sm:$0xff]
        %v409 = vld [vmem:[%s225 + $0x2c0] sm:$0xf]
        %v410 = vld [vmem:[%s225 + $0x2c4] sm:$0xff]
        %v411 = vld [vmem:[%s225 + $0x2cc] sm:$0xf]
        %v412 = vld [vmem:[%s225 + $0x2d0] sm:$0xff]
        %v413 = vld [vmem:[%s225 + $0x2d8] sm:$0xf]
        %v414 = vld [vmem:[%s225 + $0x2dc] sm:$0xff]
        %v415 = vld [vmem:[%s225 + $0x2e4] sm:$0xf]
        %v416 = vld [vmem:[%s225 + $0x2e8] sm:$0xff]
        %v417 = vld [vmem:[%s225 + $0x2f0] sm:$0xf]
        %v418 = vld [vmem:[%s225 + $0x2f4] sm:$0xff]
        %v419 = vld [vmem:[%s225 + $0x2fc] sm:$0xf]
        %v420 = vld [vmem:[%s225 + $0x300] sm:$0xff]
        %v421 = vld [vmem:[%s225 + $0x308] sm:$0xf]
        %v422 = vld [vmem:[%s225 + $0x30c] sm:$0xff]
        %v423 = vld [vmem:[%s225 + $0x314] sm:$0xf]
        %v424 = vld [vmem:[%s225 + $0x318] sm:$0xff]
        %v425 = vld [vmem:[%s225 + $0x320] sm:$0xf]
        %v426 = vld [vmem:[%s225 + $0x324] sm:$0xff]
        %v427 = vld [vmem:[%s225 + $0x32c] sm:$0xf]
        %v428 = vld [vmem:[%s225 + $0x330] sm:$0xff]
        %v429 = vld [vmem:[%s225 + $0x338] sm:$0xf]
        %v430 = vld [vmem:[%s225 + $0x33c] sm:$0xff]
        %v431 = vld [vmem:[%s225 + $0x344] sm:$0xf]
        %v432 = vld [vmem:[%s225 + $0x348] sm:$0xff]
        %v433 = vld [vmem:[%s225 + $0x350] sm:$0xf]
        %v434 = vld [vmem:[%s225 + $0x354] sm:$0xff]
        %v435 = vld [vmem:[%s225 + $0x35c] sm:$0xf]
        %v436 = vld [vmem:[%s225 + $0x360] sm:$0xff]
        %v437 = vld [vmem:[%s225 + $0x368] sm:$0xf]
        %v438 = vld [vmem:[%s225 + $0x36c] sm:$0xff]
        %v439 = vld [vmem:[%s225 + $0x374] sm:$0xf]
        %v440 = vld [vmem:[%s225 + $0x378] sm:$0xff]
        %v441 = vld [vmem:[%s225 + $0x380] sm:$0xf]
        %v442 = vld [vmem:[%s225 + $0x384] sm:$0xff]
        %v443 = vld [vmem:[%s225 + $0x38c] sm:$0xf]
        %v444 = vld [vmem:[%s225 + $0x390] sm:$0xff]
        %v445 = vld [vmem:[%s225 + $0x398] sm:$0xf]
        %v446 = vld [vmem:[%s225 + $0x39c] sm:$0xff]
        %v447 = vld [vmem:[%s225 + $0x3a4] sm:$0xf]
        %v448 = vld [vmem:[%s225 + $0x3a8] sm:$0xff]
        %v449 = vld [vmem:[%s225 + $0x3b0] sm:$0xf]
        %v450 = vld [vmem:[%s225 + $0x3b4] sm:$0xff]
        %v451 = vld [vmem:[%s225 + $0x3bc] sm:$0xf]
        %v452 = vld [vmem:[%s225 + $0x3c0] sm:$0xff]
        %v453 = vld [vmem:[%s225 + $0x3c8] sm:$0xf]
        %v454 = vld [vmem:[%s225 + $0x3cc] sm:$0xff]
        %v455 = vld [vmem:[%s225 + $0x3d4] sm:$0xf]
        %v456 = vld [vmem:[%s225 + $0x3d8] sm:$0xff]
        %v457 = vld [vmem:[%s225 + $0x3e0] sm:$0xf]
        %v458 = vld [vmem:[%s225 + $0x3e4] sm:$0xff]
        %v459 = vld [vmem:[%s225 + $0x3ec] sm:$0xf]
        %v460 = vld [vmem:[%s225 + $0x3f0] sm:$0xff]
        %v461 = vld [vmem:[%s225 + $0x3f8] sm:$0xf]
        %v462 = vld [vmem:[%s225 + $0x3fc] sm:$0xff]
        %v463 = vld [vmem:[%s225 + $0x404] sm:$0xf]
        %v464 = vld [vmem:[%s225 + $0x408] sm:$0xff]
        %v465 = vld [vmem:[%s225 + $0x410] sm:$0xf]
        %v466 = vld [vmem:[%s225 + $0x414] sm:$0xff]
        %v467 = vld [vmem:[%s225 + $0x41c] sm:$0xf]
        %v468 = vld [vmem:[%s225 + $0x420] sm:$0xff]
        %v469 = vld [vmem:[%s225 + $0x428] sm:$0xf]
        %v470 = vld [vmem:[%s225 + $0x42c] sm:$0xff]
        %v471 = vld [vmem:[%s225 + $0x434] sm:$0xf]
        %v472 = vld [vmem:[%s225 + $0x438] sm:$0xff]
        %v473 = vld [vmem:[%s225 + $0x440] sm:$0xf]
        %v474 = vld [vmem:[%s225 + $0x444] sm:$0xff]
        %v475 = vld [vmem:[%s225 + $0x44c] sm:$0xf]
        %v476 = vld [vmem:[%s225 + $0x450] sm:$0xff]
        %v477 = vld [vmem:[%s225 + $0x458] sm:$0xf]
        %v478 = vld [vmem:[%s225 + $0x45c] sm:$0xff]
        %v479 = vld [vmem:[%s225 + $0x464] sm:$0xf]
        %v480 = vld [vmem:[%s225 + $0x468] sm:$0xff]
        %v481 = vld [vmem:[%s225 + $0x470] sm:$0xf]
        %v482 = vld [vmem:[%s225 + $0x474] sm:$0xff]
        %v483 = vld [vmem:[%s225 + $0x47c] sm:$0xf]
        %v484 = vld [vmem:[%s234] sm:$0x7]
        %v486 = vlaneseq
        %v487 = vshrl.u32 %v486, 7
        %v488 = vsub.s32 0, %v487
        %v489 = vrot.slane %v484, %v488
        %v490 = vlaneseq
        %v491 = vshrl.u32 %v490, 7
        %v492 = vsub.s32 1, %v491
        %v493 = vrot.slane %v484, %v492
        %v494 = vlaneseq
        %v495 = vshrl.u32 %v494, 7
        %v496 = vsub.s32 2, %v495
        %v497 = vrot.slane %v484, %v496
        %v693 = vunpack.c.l.b16 %v292
        %v694 = vunpack.c.h.b16 %v292
        %v695 = vunpack.c.l.b16 %v293
        %v696 = vunpack.c.l.b16 %v294
        %v697 = vunpack.c.h.b16 %v294
        %v698 = vunpack.c.l.b16 %v295
        %v699 = vunpack.c.l.b16 %v296
        %v700 = vunpack.c.h.b16 %v296
        %v701 = vunpack.c.l.b16 %v297
        %v702 = vunpack.c.l.b16 %v298
        %v703 = vunpack.c.h.b16 %v298
        %v704 = vunpack.c.l.b16 %v299
        %v705 = vunpack.c.l.b16 %v300
        %v706 = vunpack.c.h.b16 %v300
        %v707 = vunpack.c.l.b16 %v301
        %v708 = vunpack.c.l.b16 %v302
        %v709 = vunpack.c.h.b16 %v302
        %v710 = vunpack.c.l.b16 %v303
        %v711 = vunpack.c.l.b16 %v304
        %v712 = vunpack.c.h.b16 %v304
        %v713 = vunpack.c.l.b16 %v305
        %v714 = vunpack.c.l.b16 %v306
        %v715 = vunpack.c.h.b16 %v306
        %v716 = vunpack.c.l.b16 %v307
        %v717 = vunpack.c.l.b16 %v308
        %v718 = vunpack.c.h.b16 %v308
        %v719 = vunpack.c.l.b16 %v309
        %v720 = vunpack.c.l.b16 %v310
        %v721 = vunpack.c.h.b16 %v310
        %v722 = vunpack.c.l.b16 %v311
        %v723 = vunpack.c.l.b16 %v312
        %v724 = vunpack.c.h.b16 %v312
        %v725 = vunpack.c.l.b16 %v313
        %v726 = vunpack.c.l.b16 %v314
        %v727 = vunpack.c.h.b16 %v314
        %v728 = vunpack.c.l.b16 %v315
        %v729 = vunpack.c.l.b16 %v316
        %v730 = vunpack.c.h.b16 %v316
        %v731 = vunpack.c.l.b16 %v317
        %v732 = vunpack.c.l.b16 %v318
        %v733 = vunpack.c.h.b16 %v318
        %v734 = vunpack.c.l.b16 %v319
        %v735 = vunpack.c.l.b16 %v320
        %v736 = vunpack.c.h.b16 %v320
        %v737 = vunpack.c.l.b16 %v321
        %v738 = vunpack.c.l.b16 %v322
        %v739 = vunpack.c.h.b16 %v322
        %v740 = vunpack.c.l.b16 %v323
        %v741 = vunpack.c.l.b16 %v324
        %v742 = vunpack.c.h.b16 %v324
        %v743 = vunpack.c.l.b16 %v325
        %v744 = vunpack.c.l.b16 %v326
        %v745 = vunpack.c.h.b16 %v326
        %v746 = vunpack.c.l.b16 %v327
        %v747 = vunpack.c.l.b16 %v328
        %v748 = vunpack.c.h.b16 %v328
        %v749 = vunpack.c.l.b16 %v329
        %v750 = vunpack.c.l.b16 %v330
        %v751 = vunpack.c.h.b16 %v330
        %v752 = vunpack.c.l.b16 %v331
        %v753 = vunpack.c.l.b16 %v332
        %v754 = vunpack.c.h.b16 %v332
        %v755 = vunpack.c.l.b16 %v333
        %v756 = vunpack.c.l.b16 %v334
        %v757 = vunpack.c.h.b16 %v334
        %v758 = vunpack.c.l.b16 %v335
        %v759 = vunpack.c.l.b16 %v336
        %v760 = vunpack.c.h.b16 %v336
        %v761 = vunpack.c.l.b16 %v337
        %v762 = vunpack.c.l.b16 %v338
        %v763 = vunpack.c.h.b16 %v338
        %v764 = vunpack.c.l.b16 %v339
        %v765 = vunpack.c.l.b16 %v340
        %v766 = vunpack.c.h.b16 %v340
        %v767 = vunpack.c.l.b16 %v341
        %v768 = vunpack.c.l.b16 %v342
        %v769 = vunpack.c.h.b16 %v342
        %v770 = vunpack.c.l.b16 %v343
        %v771 = vunpack.c.l.b16 %v344
        %v772 = vunpack.c.h.b16 %v344
        %v773 = vunpack.c.l.b16 %v345
        %v774 = vunpack.c.l.b16 %v346
        %v775 = vunpack.c.h.b16 %v346
        %v776 = vunpack.c.l.b16 %v347
        %v777 = vunpack.c.l.b16 %v348
        %v778 = vunpack.c.h.b16 %v348
        %v779 = vunpack.c.l.b16 %v349
        %v780 = vunpack.c.l.b16 %v350
        %v781 = vunpack.c.h.b16 %v350
        %v782 = vunpack.c.l.b16 %v351
        %v783 = vunpack.c.l.b16 %v352
        %v784 = vunpack.c.h.b16 %v352
        %v785 = vunpack.c.l.b16 %v353
        %v786 = vunpack.c.l.b16 %v354
        %v787 = vunpack.c.h.b16 %v354
        %v788 = vunpack.c.l.b16 %v355
        %v789 = vunpack.c.l.b16 %v356
        %v790 = vunpack.c.h.b16 %v356
        %v791 = vunpack.c.l.b16 %v357
        %v792 = vunpack.c.l.b16 %v358
        %v793 = vunpack.c.h.b16 %v358
        %v794 = vunpack.c.l.b16 %v359
        %v795 = vunpack.c.l.b16 %v360
        %v796 = vunpack.c.h.b16 %v360
        %v797 = vunpack.c.l.b16 %v361
        %v798 = vunpack.c.l.b16 %v362
        %v799 = vunpack.c.h.b16 %v362
        %v800 = vunpack.c.l.b16 %v363
        %v801 = vunpack.c.l.b16 %v364
        %v802 = vunpack.c.h.b16 %v364
        %v803 = vunpack.c.l.b16 %v365
        %v804 = vunpack.c.l.b16 %v366
        %v805 = vunpack.c.h.b16 %v366
        %v806 = vunpack.c.l.b16 %v367
        %v807 = vunpack.c.l.b16 %v368
        %v808 = vunpack.c.h.b16 %v368
        %v809 = vunpack.c.l.b16 %v369
        %v810 = vunpack.c.l.b16 %v370
        %v811 = vunpack.c.h.b16 %v370
        %v812 = vunpack.c.l.b16 %v371
        %v813 = vunpack.c.l.b16 %v372
        %v814 = vunpack.c.h.b16 %v372
        %v815 = vunpack.c.l.b16 %v373
        %v816 = vunpack.c.l.b16 %v374
        %v817 = vunpack.c.h.b16 %v374
        %v818 = vunpack.c.l.b16 %v375
        %v819 = vunpack.c.l.b16 %v376
        %v820 = vunpack.c.h.b16 %v376
        %v821 = vunpack.c.l.b16 %v377
        %v822 = vunpack.c.l.b16 %v378
        %v823 = vunpack.c.h.b16 %v378
        %v824 = vunpack.c.l.b16 %v379
        %v825 = vunpack.c.l.b16 %v380
        %v826 = vunpack.c.h.b16 %v380
        %v827 = vunpack.c.l.b16 %v381
        %v828 = vunpack.c.l.b16 %v382
        %v829 = vunpack.c.h.b16 %v382
        %v830 = vunpack.c.l.b16 %v383
        %v831 = vunpack.c.l.b16 %v384
        %v832 = vunpack.c.h.b16 %v384
        %v833 = vunpack.c.l.b16 %v385
        %v834 = vunpack.c.l.b16 %v386
        %v835 = vunpack.c.h.b16 %v386
        %v836 = vunpack.c.l.b16 %v387
        %v837 = vunpack.c.l.b16 %v388
        %v838 = vunpack.c.h.b16 %v388
        %v839 = vunpack.c.l.b16 %v389
        %v840 = vunpack.c.l.b16 %v390
        %v841 = vunpack.c.h.b16 %v390
        %v842 = vunpack.c.l.b16 %v391
        %v843 = vunpack.c.l.b16 %v392
        %v844 = vunpack.c.h.b16 %v392
        %v845 = vunpack.c.l.b16 %v393
        %v846 = vunpack.c.l.b16 %v394
        %v847 = vunpack.c.h.b16 %v394
        %v848 = vunpack.c.l.b16 %v395
        %v849 = vunpack.c.l.b16 %v396
        %v850 = vunpack.c.h.b16 %v396
        %v851 = vunpack.c.l.b16 %v397
        %v852 = vunpack.c.l.b16 %v398
        %v853 = vunpack.c.h.b16 %v398
        %v854 = vunpack.c.l.b16 %v399
        %v855 = vunpack.c.l.b16 %v400
        %v856 = vunpack.c.h.b16 %v400
        %v857 = vunpack.c.l.b16 %v401
        %v858 = vunpack.c.l.b16 %v402
        %v859 = vunpack.c.h.b16 %v402
        %v860 = vunpack.c.l.b16 %v403
        %v861 = vunpack.c.l.b16 %v404
        %v862 = vunpack.c.h.b16 %v404
        %v863 = vunpack.c.l.b16 %v405
        %v864 = vunpack.c.l.b16 %v406
        %v865 = vunpack.c.h.b16 %v406
        %v866 = vunpack.c.l.b16 %v407
        %v867 = vunpack.c.l.b16 %v408
        %v868 = vunpack.c.h.b16 %v408
        %v869 = vunpack.c.l.b16 %v409
        %v870 = vunpack.c.l.b16 %v410
        %v871 = vunpack.c.h.b16 %v410
        %v872 = vunpack.c.l.b16 %v411
        %v873 = vunpack.c.l.b16 %v412
        %v874 = vunpack.c.h.b16 %v412
        %v875 = vunpack.c.l.b16 %v413
        %v876 = vunpack.c.l.b16 %v414
        %v877 = vunpack.c.h.b16 %v414
        %v878 = vunpack.c.l.b16 %v415
        %v879 = vunpack.c.l.b16 %v416
        %v880 = vunpack.c.h.b16 %v416
        %v881 = vunpack.c.l.b16 %v417
        %v882 = vunpack.c.l.b16 %v418
        %v883 = vunpack.c.h.b16 %v418
        %v884 = vunpack.c.l.b16 %v419
        %v885 = vunpack.c.l.b16 %v420
        %v886 = vunpack.c.h.b16 %v420
        %v887 = vunpack.c.l.b16 %v421
        %v888 = vunpack.c.l.b16 %v422
        %v889 = vunpack.c.h.b16 %v422
        %v890 = vunpack.c.l.b16 %v423
        %v891 = vunpack.c.l.b16 %v424
        %v892 = vunpack.c.h.b16 %v424
        %v893 = vunpack.c.l.b16 %v425
        %v894 = vunpack.c.l.b16 %v426
        %v895 = vunpack.c.h.b16 %v426
        %v896 = vunpack.c.l.b16 %v427
        %v897 = vunpack.c.l.b16 %v428
        %v898 = vunpack.c.h.b16 %v428
        %v899 = vunpack.c.l.b16 %v429
        %v900 = vunpack.c.l.b16 %v430
        %v901 = vunpack.c.h.b16 %v430
        %v902 = vunpack.c.l.b16 %v431
        %v903 = vunpack.c.l.b16 %v432
        %v904 = vunpack.c.h.b16 %v432
        %v905 = vunpack.c.l.b16 %v433
        %v906 = vunpack.c.l.b16 %v434
        %v907 = vunpack.c.h.b16 %v434
        %v908 = vunpack.c.l.b16 %v435
        %v909 = vunpack.c.l.b16 %v436
        %v910 = vunpack.c.h.b16 %v436
        %v911 = vunpack.c.l.b16 %v437
        %v912 = vunpack.c.l.b16 %v438
        %v913 = vunpack.c.h.b16 %v438
        %v914 = vunpack.c.l.b16 %v439
        %v915 = vunpack.c.l.b16 %v440
        %v916 = vunpack.c.h.b16 %v440
        %v917 = vunpack.c.l.b16 %v441
        %v918 = vunpack.c.l.b16 %v442
        %v919 = vunpack.c.h.b16 %v442
        %v920 = vunpack.c.l.b16 %v443
        %v921 = vunpack.c.l.b16 %v444
        %v922 = vunpack.c.h.b16 %v444
        %v923 = vunpack.c.l.b16 %v445
        %v924 = vunpack.c.l.b16 %v446
        %v925 = vunpack.c.h.b16 %v446
        %v926 = vunpack.c.l.b16 %v447
        %v927 = vunpack.c.l.b16 %v448
        %v928 = vunpack.c.h.b16 %v448
        %v929 = vunpack.c.l.b16 %v449
        %v930 = vunpack.c.l.b16 %v450
        %v931 = vunpack.c.h.b16 %v450
        %v932 = vunpack.c.l.b16 %v451
        %v933 = vunpack.c.l.b16 %v452
        %v934 = vunpack.c.h.b16 %v452
        %v935 = vunpack.c.l.b16 %v453
        %v936 = vunpack.c.l.b16 %v454
        %v937 = vunpack.c.h.b16 %v454
        %v938 = vunpack.c.l.b16 %v455
        %v939 = vunpack.c.l.b16 %v456
        %v940 = vunpack.c.h.b16 %v456
        %v941 = vunpack.c.l.b16 %v457
        %v942 = vunpack.c.l.b16 %v458
        %v943 = vunpack.c.h.b16 %v458
        %v944 = vunpack.c.l.b16 %v459
        %v945 = vunpack.c.l.b16 %v460
        %v946 = vunpack.c.h.b16 %v460
        %v947 = vunpack.c.l.b16 %v461
        %v948 = vunpack.c.l.b16 %v462
        %v949 = vunpack.c.h.b16 %v462
        %v950 = vunpack.c.l.b16 %v463
        %v951 = vunpack.c.l.b16 %v464
        %v952 = vunpack.c.h.b16 %v464
        %v953 = vunpack.c.l.b16 %v465
        %v954 = vunpack.c.l.b16 %v466
        %v955 = vunpack.c.h.b16 %v466
        %v956 = vunpack.c.l.b16 %v467
        %v957 = vunpack.c.l.b16 %v468
        %v958 = vunpack.c.h.b16 %v468
        %v959 = vunpack.c.l.b16 %v469
        %v960 = vunpack.c.l.b16 %v470
        %v961 = vunpack.c.h.b16 %v470
        %v962 = vunpack.c.l.b16 %v471
        %v963 = vunpack.c.l.b16 %v472
        %v964 = vunpack.c.h.b16 %v472
        %v965 = vunpack.c.l.b16 %v473
        %v966 = vunpack.c.l.b16 %v474
        %v967 = vunpack.c.h.b16 %v474
        %v968 = vunpack.c.l.b16 %v475
        %v969 = vunpack.c.l.b16 %v476
        %v970 = vunpack.c.h.b16 %v476
        %v971 = vunpack.c.l.b16 %v477
        %v972 = vunpack.c.l.b16 %v478
        %v973 = vunpack.c.h.b16 %v478
        %v974 = vunpack.c.l.b16 %v479
        %v975 = vunpack.c.l.b16 %v480
        %v976 = vunpack.c.h.b16 %v480
        %v977 = vunpack.c.l.b16 %v481
        %v978 = vunpack.c.l.b16 %v482
        %v979 = vunpack.c.h.b16 %v482
        %v980 = vunpack.c.l.b16 %v483
        %v981 = vpack.c.b16 %v696, %v693
        %v982 = vpack.c.b16 %v697, %v694
        %v983 = vpack.c.b16 %v698, %v695
        %v984 = vpack.c.b16 %v702, %v699
        %v985 = vpack.c.b16 %v703, %v700
        %v986 = vpack.c.b16 %v704, %v701
        %v987 = vpack.c.b16 %v708, %v705
        %v988 = vpack.c.b16 %v709, %v706
        %v989 = vpack.c.b16 %v710, %v707
        %v990 = vpack.c.b16 %v714, %v711
        %v991 = vpack.c.b16 %v715, %v712
        %v992 = vpack.c.b16 %v716, %v713
        %v993 = vpack.c.b16 %v720, %v717
        %v994 = vpack.c.b16 %v721, %v718
        %v995 = vpack.c.b16 %v722, %v719
        %v996 = vpack.c.b16 %v726, %v723
        %v997 = vpack.c.b16 %v727, %v724
        %v998 = vpack.c.b16 %v728, %v725
        %v999 = vpack.c.b16 %v732, %v729
        %v1000 = vpack.c.b16 %v733, %v730
        %v1001 = vpack.c.b16 %v734, %v731
        %v1002 = vpack.c.b16 %v738, %v735
        %v1003 = vpack.c.b16 %v739, %v736
        %v1004 = vpack.c.b16 %v740, %v737
        %v1005 = vpack.c.b16 %v744, %v741
        %v1006 = vpack.c.b16 %v745, %v742
        %v1007 = vpack.c.b16 %v746, %v743
        %v1008 = vpack.c.b16 %v750, %v747
        %v1009 = vpack.c.b16 %v751, %v748
        %v1010 = vpack.c.b16 %v752, %v749
        %v1011 = vpack.c.b16 %v756, %v753
        %v1012 = vpack.c.b16 %v757, %v754
        %v1013 = vpack.c.b16 %v758, %v755
        %v1014 = vpack.c.b16 %v762, %v759
        %v1015 = vpack.c.b16 %v763, %v760
        %v1016 = vpack.c.b16 %v764, %v761
        %v1017 = vpack.c.b16 %v768, %v765
        %v1018 = vpack.c.b16 %v769, %v766
        %v1019 = vpack.c.b16 %v770, %v767
        %v1020 = vpack.c.b16 %v774, %v771
        %v1021 = vpack.c.b16 %v775, %v772
        %v1022 = vpack.c.b16 %v776, %v773
        %v1023 = vpack.c.b16 %v780, %v777
        %v1024 = vpack.c.b16 %v781, %v778
        %v1025 = vpack.c.b16 %v782, %v779
        %v1026 = vpack.c.b16 %v786, %v783
        %v1027 = vpack.c.b16 %v787, %v784
        %v1028 = vpack.c.b16 %v788, %v785
        %v1029 = vpack.c.b16 %v792, %v789
        %v1030 = vpack.c.b16 %v793, %v790
        %v1031 = vpack.c.b16 %v794, %v791
        %v1032 = vpack.c.b16 %v798, %v795
        %v1033 = vpack.c.b16 %v799, %v796
        %v1034 = vpack.c.b16 %v800, %v797
        %v1035 = vpack.c.b16 %v804, %v801
        %v1036 = vpack.c.b16 %v805, %v802
        %v1037 = vpack.c.b16 %v806, %v803
        %v1038 = vpack.c.b16 %v810, %v807
        %v1039 = vpack.c.b16 %v811, %v808
        %v1040 = vpack.c.b16 %v812, %v809
        %v1041 = vpack.c.b16 %v816, %v813
        %v1042 = vpack.c.b16 %v817, %v814
        %v1043 = vpack.c.b16 %v818, %v815
        %v1044 = vpack.c.b16 %v822, %v819
        %v1045 = vpack.c.b16 %v823, %v820
        %v1046 = vpack.c.b16 %v824, %v821
        %v1047 = vpack.c.b16 %v828, %v825
        %v1048 = vpack.c.b16 %v829, %v826
        %v1049 = vpack.c.b16 %v830, %v827
        %v1050 = vpack.c.b16 %v834, %v831
        %v1051 = vpack.c.b16 %v835, %v832
        %v1052 = vpack.c.b16 %v836, %v833
        %v1053 = vpack.c.b16 %v840, %v837
        %v1054 = vpack.c.b16 %v841, %v838
        %v1055 = vpack.c.b16 %v842, %v839
        %v1056 = vpack.c.b16 %v846, %v843
        %v1057 = vpack.c.b16 %v847, %v844
        %v1058 = vpack.c.b16 %v848, %v845
        %v1059 = vpack.c.b16 %v852, %v849
        %v1060 = vpack.c.b16 %v853, %v850
        %v1061 = vpack.c.b16 %v854, %v851
        %v1062 = vpack.c.b16 %v858, %v855
        %v1063 = vpack.c.b16 %v859, %v856
        %v1064 = vpack.c.b16 %v860, %v857
        %v1065 = vpack.c.b16 %v864, %v861
        %v1066 = vpack.c.b16 %v865, %v862
        %v1067 = vpack.c.b16 %v866, %v863
        %v1068 = vpack.c.b16 %v870, %v867
        %v1069 = vpack.c.b16 %v871, %v868
        %v1070 = vpack.c.b16 %v872, %v869
        %v1071 = vpack.c.b16 %v876, %v873
        %v1072 = vpack.c.b16 %v877, %v874
        %v1073 = vpack.c.b16 %v878, %v875
        %v1074 = vpack.c.b16 %v882, %v879
        %v1075 = vpack.c.b16 %v883, %v880
        %v1076 = vpack.c.b16 %v884, %v881
        %v1077 = vpack.c.b16 %v888, %v885
        %v1078 = vpack.c.b16 %v889, %v886
        %v1079 = vpack.c.b16 %v890, %v887
        %v1080 = vpack.c.b16 %v894, %v891
        %v1081 = vpack.c.b16 %v895, %v892
        %v1082 = vpack.c.b16 %v896, %v893
        %v1083 = vpack.c.b16 %v900, %v897
        %v1084 = vpack.c.b16 %v901, %v898
        %v1085 = vpack.c.b16 %v902, %v899
        %v1086 = vpack.c.b16 %v906, %v903
        %v1087 = vpack.c.b16 %v907, %v904
        %v1088 = vpack.c.b16 %v908, %v905
        %v1089 = vpack.c.b16 %v912, %v909
        %v1090 = vpack.c.b16 %v913, %v910
        %v1091 = vpack.c.b16 %v914, %v911
        %v1092 = vpack.c.b16 %v918, %v915
        %v1093 = vpack.c.b16 %v919, %v916
        %v1094 = vpack.c.b16 %v920, %v917
        %v1095 = vpack.c.b16 %v924, %v921
        %v1096 = vpack.c.b16 %v925, %v922
        %v1097 = vpack.c.b16 %v926, %v923
        %v1098 = vpack.c.b16 %v930, %v927
        %v1099 = vpack.c.b16 %v931, %v928
        %v1100 = vpack.c.b16 %v932, %v929
        %v1101 = vpack.c.b16 %v936, %v933
        %v1102 = vpack.c.b16 %v937, %v934
        %v1103 = vpack.c.b16 %v938, %v935
        %v1104 = vpack.c.b16 %v942, %v939
        %v1105 = vpack.c.b16 %v943, %v940
        %v1106 = vpack.c.b16 %v944, %v941
        %v1107 = vpack.c.b16 %v948, %v945
        %v1108 = vpack.c.b16 %v949, %v946
        %v1109 = vpack.c.b16 %v950, %v947
        %v1110 = vpack.c.b16 %v954, %v951
        %v1111 = vpack.c.b16 %v955, %v952
        %v1112 = vpack.c.b16 %v956, %v953
        %v1113 = vpack.c.b16 %v960, %v957
        %v1114 = vpack.c.b16 %v961, %v958
        %v1115 = vpack.c.b16 %v962, %v959
        %v1116 = vpack.c.b16 %v966, %v963
        %v1117 = vpack.c.b16 %v967, %v964
        %v1118 = vpack.c.b16 %v968, %v965
        %v1119 = vpack.c.b16 %v972, %v969
        %v1120 = vpack.c.b16 %v973, %v970
        %v1121 = vpack.c.b16 %v974, %v971
        %v1122 = vpack.c.b16 %v978, %v975
        %v1123 = vpack.c.b16 %v979, %v976
        %v1124 = vpack.c.b16 %v980, %v977
        %1269 = vmatprep.subr.bf16.mxu0 %v1003
        %1270 = vmatpush1.bf16.msra.mxu0 %v1002
        %1271 = vmatprep.subr.bf16.mxu0 %v1000
        %1272 = vmatpush1.bf16.msra.mxu0 %v999
        %1273 = vmatprep.subr.bf16.mxu0 %v997
        %1274 = vmatpush1.bf16.msra.mxu0 %v996
        %1275 = vmatprep.subr.bf16.mxu0 %v994
        %1276 = vmatpush1.bf16.msra.mxu0 %v993
        %1277 = vmatprep.subr.bf16.mxu0 %v991
        %1278 = vmatpush1.bf16.msra.mxu0 %v990
        %1279 = vmatprep.subr.bf16.mxu0 %v988
        %1280 = vmatpush1.bf16.msra.mxu0 %v987
        %1281 = vmatprep.subr.bf16.mxu0 %v985
        %1282 = vmatpush1.bf16.msra.mxu0 %v984
        %1283 = vmatprep.subr.bf16.mxu0 %v982
        %1284 = vmatpush1.bf16.msra.mxu0 %v981
        %1285 = vmatprep.subr.bf16.mxu0 %v1027
        %1286 = vmatpush2.bf16.msra.mxu0 %v1026
        %1287 = vmatprep.subr.bf16.mxu0 %v1024
        %1288 = vmatpush2.bf16.msra.mxu0 %v1023
        %1289 = vmatprep.subr.bf16.mxu0 %v1021
        %1290 = vmatpush2.bf16.msra.mxu0 %v1020
        %1291 = vmatprep.subr.bf16.mxu0 %v1018
        %1292 = vmatpush2.bf16.msra.mxu0 %v1017
        %1293 = vmatprep.subr.bf16.mxu0 %v1015
        %1294 = vmatpush2.bf16.msra.mxu0 %v1014
        %1295 = vmatprep.subr.bf16.mxu0 %v1012
        %1296 = vmatpush2.bf16.msra.mxu0 %v1011
        %1297 = vmatprep.subr.bf16.mxu0 %v1009
        %1298 = vmatpush2.bf16.msra.mxu0 %v1008
        %1299 = vmatprep.subr.bf16.mxu0 %v1006
        %1300 = vmatpush2.bf16.msra.mxu0 %v1005
        %1301 = vmatprep.mubr.bf16.mxu0 %v287
        %1302 = vmatmul.mubr.bf16.gmra.mxu0 %v286
        %v1303 = vpop.f32.mrf.mxu0
        %v1304 = vadd.f32 %v489, %v1303
        %v1305 = vpop.f32.mrf.mxu0
        %v1306 = vadd.f32 %v493, %v1305
        %v1307 = vpop.f32.mrf.mxu0
        %v1308 = vpop.f32.mrf.mxu0
        %1309 = vdwg.mxu0
        %1310 = vmatprep.subr.bf16.mxu0 %v1051
        %1311 = vmatpush1.bf16.msra.mxu0 %v1050
        %1312 = vmatprep.subr.bf16.mxu0 %v1048
        %1313 = vmatpush1.bf16.msra.mxu0 %v1047
        %1314 = vmatprep.subr.bf16.mxu0 %v1045
        %1315 = vmatpush1.bf16.msra.mxu0 %v1044
        %1316 = vmatprep.subr.bf16.mxu0 %v1042
        %1317 = vmatpush1.bf16.msra.mxu0 %v1041
        %1318 = vmatprep.subr.bf16.mxu0 %v1039
        %1319 = vmatpush1.bf16.msra.mxu0 %v1038
        %1320 = vmatprep.subr.bf16.mxu0 %v1036
        %1321 = vmatpush1.bf16.msra.mxu0 %v1035
        %1322 = vmatprep.subr.bf16.mxu0 %v1033
        %1323 = vmatpush1.bf16.msra.mxu0 %v1032
        %1324 = vmatprep.subr.bf16.mxu0 %v1030
        %1325 = vmatpush1.bf16.msra.mxu0 %v1029
        %1326 = vmatprep.subr.bf16.mxu0 %v1075
        %1327 = vmatpush2.bf16.msra.mxu0 %v1074
        %1328 = vmatprep.subr.bf16.mxu0 %v1072
        %1329 = vmatpush2.bf16.msra.mxu0 %v1071
        %1330 = vmatprep.subr.bf16.mxu0 %v1069
        %1331 = vmatpush2.bf16.msra.mxu0 %v1068
        %1332 = vmatprep.subr.bf16.mxu0 %v1066
        %1333 = vmatpush2.bf16.msra.mxu0 %v1065
        %1334 = vmatprep.subr.bf16.mxu0 %v1063
        %1335 = vmatpush2.bf16.msra.mxu0 %v1062
        %1336 = vmatprep.subr.bf16.mxu0 %v1060
        %1337 = vmatpush2.bf16.msra.mxu0 %v1059
        %1338 = vmatprep.subr.bf16.mxu0 %v1057
        %1339 = vmatpush2.bf16.msra.mxu0 %v1056
        %1340 = vmatprep.subr.bf16.mxu0 %v1054
        %1341 = vmatpush2.bf16.msra.mxu0 %v1053
        %1342 = vmatprep.mubr.bf16.mxu0 %v289
        %1343 = vmatmul.mubr.bf16.gmra.mxu0 %v288
        %v1344 = vpop.f32.mrf.mxu0
        %v1345 = vadd.f32 %v1304, %v1344
        %v1346 = vpop.f32.mrf.mxu0
        %v1347 = vadd.f32 %v1306, %v1346
        %v1348 = vpop.f32.mrf.mxu0
        %v1349 = vpop.f32.mrf.mxu0
        %1350 = vdwg.mxu0
        %1351 = vmatprep.subr.bf16.mxu0 %v1099
        %1352 = vmatpush1.bf16.msra.mxu0 %v1098
        %1353 = vmatprep.subr.bf16.mxu0 %v1096
        %1354 = vmatpush1.bf16.msra.mxu0 %v1095
        %1355 = vmatprep.subr.bf16.mxu0 %v1093
        %1356 = vmatpush1.bf16.msra.mxu0 %v1092
        %1357 = vmatprep.subr.bf16.mxu0 %v1090
        %1358 = vmatpush1.bf16.msra.mxu0 %v1089
        %1359 = vmatprep.subr.bf16.mxu0 %v1087
        %1360 = vmatpush1.bf16.msra.mxu0 %v1086
        %1361 = vmatprep.subr.bf16.mxu0 %v1084
        %1362 = vmatpush1.bf16.msra.mxu0 %v1083
        %1363 = vmatprep.subr.bf16.mxu0 %v1081
        %1364 = vmatpush1.bf16.msra.mxu0 %v1080
        %1365 = vmatprep.subr.bf16.mxu0 %v1078
        %1366 = vmatpush1.bf16.msra.mxu0 %v1077
        %1367 = vmatprep.subr.bf16.mxu0 %v1123
        %1368 = vmatpush2.bf16.msra.mxu0 %v1122
        %1369 = vmatprep.subr.bf16.mxu0 %v1120
        %1370 = vmatpush2.bf16.msra.mxu0 %v1119
        %1371 = vmatprep.subr.bf16.mxu0 %v1117
        %1372 = vmatpush2.bf16.msra.mxu0 %v1116
        %1373 = vmatprep.subr.bf16.mxu0 %v1114
        %1374 = vmatpush2.bf16.msra.mxu0 %v1113
        %1375 = vmatprep.subr.bf16.mxu0 %v1111
        %1376 = vmatpush2.bf16.msra.mxu0 %v1110
        %1377 = vmatprep.subr.bf16.mxu0 %v1108
        %1378 = vmatpush2.bf16.msra.mxu0 %v1107
        %1379 = vmatprep.subr.bf16.mxu0 %v1105
        %1380 = vmatpush2.bf16.msra.mxu0 %v1104
        %1381 = vmatprep.subr.bf16.mxu0 %v1102
        %1382 = vmatpush2.bf16.msra.mxu0 %v1101
        %1383 = vmatprep.mubr.bf16.mxu0 %v291
        %1384 = vmatmul.mubr.bf16.gmra.mxu0 %v290
        %v1385 = vpop.f32.mrf.mxu0
        %v1386 = vadd.f32 %v1345, %v1385
        %v1387 = vpop.f32.mrf.mxu0
        %v1388 = vadd.f32 %v1347, %v1387
        %v1389 = vpop.f32.mrf.mxu0
        %v1390 = vpop.f32.mrf.mxu0
        %1391 = vdwg.mxu0
        %1392 = vmatprep.subr.bf16.mxu0 0
        %1393 = vmatpush1.bf16.msra.mxu0 %v1004
        %1394 = vmatprep.subr.bf16.mxu0 0
        %1395 = vmatpush1.bf16.msra.mxu0 %v1001
        %1396 = vmatprep.subr.bf16.mxu0 0
        %1397 = vmatpush1.bf16.msra.mxu0 %v998
        %1398 = vmatprep.subr.bf16.mxu0 0
        %1399 = vmatpush1.bf16.msra.mxu0 %v995
        %1400 = vmatprep.subr.bf16.mxu0 0
        %1401 = vmatpush1.bf16.msra.mxu0 %v992
        %1402 = vmatprep.subr.bf16.mxu0 0
        %1403 = vmatpush1.bf16.msra.mxu0 %v989
        %1404 = vmatprep.subr.bf16.mxu0 0
        %1405 = vmatpush1.bf16.msra.mxu0 %v986
        %1406 = vmatprep.subr.bf16.mxu0 0
        %1407 = vmatpush1.bf16.msra.mxu0 %v983
        %1408 = vmatprep.subr.bf16.mxu0 0
        %1409 = vmatpush2.bf16.msra.mxu0 %v1028
        %1410 = vmatprep.subr.bf16.mxu0 0
        %1411 = vmatpush2.bf16.msra.mxu0 %v1025
        %1412 = vmatprep.subr.bf16.mxu0 0
        %1413 = vmatpush2.bf16.msra.mxu0 %v1022
        %1414 = vmatprep.subr.bf16.mxu0 0
        %1415 = vmatpush2.bf16.msra.mxu0 %v1019
        %1416 = vmatprep.subr.bf16.mxu0 0
        %1417 = vmatpush2.bf16.msra.mxu0 %v1016
        %1418 = vmatprep.subr.bf16.mxu0 0
        %1419 = vmatpush2.bf16.msra.mxu0 %v1013
        %1420 = vmatprep.subr.bf16.mxu0 0
        %1421 = vmatpush2.bf16.msra.mxu0 %v1010
        %1422 = vmatprep.subr.bf16.mxu0 0
        %1423 = vmatpush2.bf16.msra.mxu0 %v1007
        %1424 = vmatprep.mubr.bf16.mxu0 %v287
        %1425 = vmatmul.mubr.bf16.gmra.mxu0 %v286
        %v1426 = vpop.f32.mrf.mxu0
        %v1427 = vadd.f32 %v497, %v1426
        %v1428 = vpop.f32.mrf.mxu0
        %v1429 = vpop.f32.mrf.mxu0
        %v1430 = vpop.f32.mrf.mxu0
        %1431 = vdwg.mxu0
        %1432 = vmatprep.subr.bf16.mxu0 0
        %1433 = vmatpush1.bf16.msra.mxu0 %v1052
        %1434 = vmatprep.subr.bf16.mxu0 0
        %1435 = vmatpush1.bf16.msra.mxu0 %v1049
        %1436 = vmatprep.subr.bf16.mxu0 0
        %1437 = vmatpush1.bf16.msra.mxu0 %v1046
        %1438 = vmatprep.subr.bf16.mxu0 0
        %1439 = vmatpush1.bf16.msra.mxu0 %v1043
        %1440 = vmatprep.subr.bf16.mxu0 0
        %1441 = vmatpush1.bf16.msra.mxu0 %v1040
        %1442 = vmatprep.subr.bf16.mxu0 0
        %1443 = vmatpush1.bf16.msra.mxu0 %v1037
        %1444 = vmatprep.subr.bf16.mxu0 0
        %1445 = vmatpush1.bf16.msra.mxu0 %v1034
        %1446 = vmatprep.subr.bf16.mxu0 0
        %1447 = vmatpush1.bf16.msra.mxu0 %v1031
        %1448 = vmatprep.subr.bf16.mxu0 0
        %1449 = vmatpush2.bf16.msra.mxu0 %v1076
        %1450 = vmatprep.subr.bf16.mxu0 0
        %1451 = vmatpush2.bf16.msra.mxu0 %v1073
        %1452 = vmatprep.subr.bf16.mxu0 0
        %1453 = vmatpush2.bf16.msra.mxu0 %v1070
        %1454 = vmatprep.subr.bf16.mxu0 0
        %1455 = vmatpush2.bf16.msra.mxu0 %v1067
        %1456 = vmatprep.subr.bf16.mxu0 0
        %1457 = vmatpush2.bf16.msra.mxu0 %v1064
        %1458 = vmatprep.subr.bf16.mxu0 0
        %1459 = vmatpush2.bf16.msra.mxu0 %v1061
        %1460 = vmatprep.subr.bf16.mxu0 0
        %1461 = vmatpush2.bf16.msra.mxu0 %v1058
        %1462 = vmatprep.subr.bf16.mxu0 0
        %1463 = vmatpush2.bf16.msra.mxu0 %v1055
        %1464 = vmatprep.mubr.bf16.mxu0 %v289
        %1465 = vmatmul.mubr.bf16.gmra.mxu0 %v288
        %v1466 = vpop.f32.mrf.mxu0
        %v1467 = vadd.f32 %v1427, %v1466
        %v1468 = vpop.f32.mrf.mxu0
        %v1469 = vpop.f32.mrf.mxu0
        %v1470 = vpop.f32.mrf.mxu0
        %1471 = vdwg.mxu0
        %1472 = vmatprep.subr.bf16.mxu0 0
        %1473 = vmatpush1.bf16.msra.mxu0 %v1100
        %1474 = vmatprep.subr.bf16.mxu0 0
        %1475 = vmatpush1.bf16.msra.mxu0 %v1097
        %1476 = vmatprep.subr.bf16.mxu0 0
        %1477 = vmatpush1.bf16.msra.mxu0 %v1094
        %1478 = vmatprep.subr.bf16.mxu0 0
        %1479 = vmatpush1.bf16.msra.mxu0 %v1091
        %1480 = vmatprep.subr.bf16.mxu0 0
        %1481 = vmatpush1.bf16.msra.mxu0 %v1088
        %1482 = vmatprep.subr.bf16.mxu0 0
        %1483 = vmatpush1.bf16.msra.mxu0 %v1085
        %1484 = vmatprep.subr.bf16.mxu0 0
        %1485 = vmatpush1.bf16.msra.mxu0 %v1082
        %1486 = vmatprep.subr.bf16.mxu0 0
        %1487 = vmatpush1.bf16.msra.mxu0 %v1079
        %1488 = vmatprep.subr.bf16.mxu0 0
        %1489 = vmatpush2.bf16.msra.mxu0 %v1124
        %1490 = vmatprep.subr.bf16.mxu0 0
        %1491 = vmatpush2.bf16.msra.mxu0 %v1121
        %1492 = vmatprep.subr.bf16.mxu0 0
        %1493 = vmatpush2.bf16.msra.mxu0 %v1118
        %1494 = vmatprep.subr.bf16.mxu0 0
        %1495 = vmatpush2.bf16.msra.mxu0 %v1115
        %1496 = vmatprep.subr.bf16.mxu0 0
        %1497 = vmatpush2.bf16.msra.mxu0 %v1112
        %1498 = vmatprep.subr.bf16.mxu0 0
        %1499 = vmatpush2.bf16.msra.mxu0 %v1109
        %1500 = vmatprep.subr.bf16.mxu0 0
        %1501 = vmatpush2.bf16.msra.mxu0 %v1106
        %1502 = vmatprep.subr.bf16.mxu0 0
        %1503 = vmatpush2.bf16.msra.mxu0 %v1103
        %1504 = vmatprep.mubr.bf16.mxu0 %v291
        %1505 = vmatmul.mubr.bf16.gmra.mxu0 %v290
        %v1506 = vpop.f32.mrf.mxu0
        %v1507 = vadd.f32 %v1467, %v1506
        %v1508 = vpop.f32.mrf.mxu0
        %v1509 = vpop.f32.mrf.mxu0
        %v1510 = vpop.f32.mrf.mxu0
        %1511 = vdwg.mxu0
        %1512 = vst [vmem:[%s263] sm:$0xff] %v1386
        %1513 = vst [vmem:[%s263 + $0x8] sm:$0xff] %v1388
        %1514 = vst [vmem:[%s263 + $0x10] sm:$0xff] %v1507
        %s1515 = sand.u32 %s124, 1
        %s1516 = scalar_lea.sflag [#allocation4], %s1515
        %s1517 = sand.u32 %s124, 1
        %s1518 = smul.addr %s1517, 24
        %s1519 = scalar_lea.vmem [#allocation8], %s1518
        // Predicated region
        $region49: #{coconut_forward.1} parent=35 // pred_check
          %p1520 = pneg %p134
        $region50: #{coconut_forward.1} parent=35 // pred_check_branch
          %1522 = sbr.rel (%p1520) target = $region52
        $region51: #{coconut_forward.1} parent=35 // pred_region
          %s1523 = smul.u32 3, %s22
          %s1525 = ssub.s32 384, 384
          %1526 = vsyncadd %s1516, %s1525
          %s1527 = smul.addr %s1523, 128
          %s1528 = scalar_lea.hbm %s4, %s1527
          %s1530 = sshll.u32 %s1519, 4
          %s1531 = int_to_ptr.vmem [resolvable:$true] %s1530
          %1533 = dma.vmem_to_hbm [thread:$0]  %s1531, 384, %s1528, %s1516
        $region52: #{coconut_forward.1} parent=35 // pred_fallthru
          _
      $region36: #{coconut_forward.1} parent=5 // pred_fallthru
        _
      %p1534 = scmp.le.s32.totalorder 2, %s17
      // Predicated region
      $region53: #{coconut_forward.1} parent=5 // pred_check
        %p1535 = pneg %p1534
      $region54: #{coconut_forward.1} parent=5 // pred_check_branch
        %1537 = sbr.rel (%p1535) target = $region56
      $region55: #{coconut_forward.1} parent=5 // pred_region
        %s1538 = ssub.s32 %s17, 2
        // Predicated region
        $region57: #{coconut_forward.1} parent=55 // pred_check
          %p1539 = pneg %p140
        $region58: #{coconut_forward.1} parent=55 // pred_check_branch
          %1541 = sbr.rel (%p1539) target = $region60
        $region59: #{coconut_forward.1} parent=55 // pred_region
          %s1542 = sand.u32 %s125, 1
          %s1543 = scalar_lea.sflag [#allocation4], %s1542
          %s1544 = sand.u32 %s125, 1
          %s1545 = smul.addr %s1544, 24
          %s1546 = scalar_lea.vmem [#allocation8], %s1545
          %1547 = dma.done %s1543, 384
        $region60: #{coconut_forward.1} parent=55 // pred_fallthru
          _
      $region56: #{coconut_forward.1} parent=5 // pred_fallthru
        _
    $region6: #{coconut_forward.1} parent=1 // loop_footer
      %s21 = sadd.s32 1, %s17
    $region7: #{coconut_forward.1} parent=1 // loop_footer_branch
      %16 = sbr.rel target = $region3
    $region8: #{coconut_forward.1} parent=1 // loop_exit
      _
    %1548 = vsyncpa [#allocation3], 1
    %s1549 = scalar_lea.sflag [#allocation3], 1
    %1550 = vsyncpa %s1549, 1
    %1551 = vsyncpa [#allocation6], 1
    %s1552 = scalar_lea.sflag [#allocation6], 1
    %1553 = vsyncpa %s1552, 1
    %1554 = vsyncpa [#allocation4], 1
    %s1555 = scalar_lea.sflag [#allocation4], 1
    %1556 = vsyncpa %s1555, 1

</llo_original>
